<compile_context>
chip_gen: v5e
topology: v5e:2x2
jax: 0.10.0
libtpu: 0.0.40
codegen_flags: <defaults>
</compile_context>

<pallas_src>
import math
import functools

import jax
import jax.numpy as jnp
from jax.experimental import pallas as pl
from jax.experimental.pallas import tpu as pltpu

_SQRT2 = math.sqrt(2.0)


def _round_up(x, m):
    return ((x + m - 1) // m) * m


# ---------------------------------------------------------------------------
# Fused MLP kernel: all FullyConnectedLayers of the MLP in one body.
# refs = (x_ref, w0, b0, w1, b1, ..., o_ref)
#   w_l: (in_l, out_l) bf16, already scaled by weight_gain and transposed
#   b_l: (1, out_l)    f32,  already scaled by bias_gain
# ---------------------------------------------------------------------------
def _mlp_fused_kernel(*refs, activations):
    x_ref = refs[0]
    o_ref = refs[-1]
    params = refs[1:-1]

    h = x_ref[...].astype(jnp.float32)                      # (TM, C)
    for idx, act in enumerate(activations):
        w = params[2 * idx][...]                            # (K, N) bf16, resident
        b = params[2 * idx + 1][...]                        # (1, N) f32,  resident
        # MXU: bf16 operands, f32 accumulation. Weight already (K, N): no .T.
        y = jnp.dot(h.astype(jnp.bfloat16), w,
                    preferred_element_type=jnp.float32)
        y = y + b
        if act == "lrelu":
            # StyleGAN bias_act 'lrelu': slope 0.2, gain sqrt(2)
            y = jnp.where(y >= 0.0, y, jnp.float32(0.2) * y) * jnp.float32(_SQRT2)
        elif act == "relu":
            # StyleGAN bias_act 'relu': gain sqrt(2)
            y = jnp.maximum(y, 0.0) * jnp.float32(_SQRT2)
        # 'linear': nothing
        h = y
    o_ref[...] = h.astype(o_ref.dtype)


def mlp_forward_2d(x, kernel_params, activations, *, tm=512):
    """x: (M, C) float32. kernel_params: [(w_l (in,out) bf16, b_l (1,out) f32), ...]."""
    M, C = x.shape
    n_out = kernel_params[-1][0].shape[1]

    # Row-tile: multiple of 8 sublanes, shape-robust for any M (ragged last
    # block is masked on store by Pallas). Weights are tiny and stay resident.
    TM = min(tm, _round_up(M, 8))
    grid = (pl.cdiv(M, TM),)

    in_specs = [pl.BlockSpec((TM, C), lambda i: (i, 0))]
    flat_params = []
    for w, b in kernel_params:
        kw, nw = w.shape
        in_specs.append(pl.BlockSpec((kw, nw), lambda i: (0, 0)))   # VMEM-resident
        in_specs.append(pl.BlockSpec((1, nw), lambda i: (0, 0)))    # VMEM-resident
        flat_params += [w, b]
    out_specs = pl.BlockSpec((TM, n_out), lambda i: (i, 0))

    flops = sum(2 * M * w.shape[0] * w.shape[1] for w, _ in kernel_params)
    bytes_accessed = (
        x.size * x.dtype.itemsize
        + M * n_out * x.dtype.itemsize
        + sum(w.size * w.dtype.itemsize + b.size * b.dtype.itemsize
              for w, b in kernel_params)
    )

    kernel = functools.partial(_mlp_fused_kernel, activations=tuple(activations))
    return pl.pallas_call(
        kernel,
        out_shape=jax.ShapeDtypeStruct((M, n_out), x.dtype),
        grid=grid,
        in_specs=in_specs,
        out_specs=out_specs,
        compiler_params=pltpu.CompilerParams(
            dimension_semantics=("parallel",),     # shard M across TCs on v7x
            vmem_limit_bytes=32 * 1024 * 1024,     # safe on v5e/v6e/v7x (64 MiB)
        ),
        cost_estimate=pl.CostEstimate(
            flops=flops, transcendentals=0, bytes_accessed=bytes_accessed),
    )(x, *flat_params)


# ---------------------------------------------------------------------------
# MLP built from FullyConnectedLayer's (StyleGAN-style parameterization)
# ---------------------------------------------------------------------------
class MLP:
    def __init__(self, features_list, activation="linear", lr_multiplier=1.0,
                 linear_out=False, *, key):
        num_layers = len(features_list) - 1
        self.num_layers = num_layers
        self.out_dim = features_list[-1]
        self.layers = []
        keys = jax.random.split(key, num_layers)
        for idx in range(num_layers):
            in_f = features_list[idx]
            out_f = features_list[idx + 1]
            act = activation
            if linear_out and idx == num_layers - 1:
                act = "linear"
            # FullyConnectedLayer init: weight ~ randn(out,in) * (weight_init/lr_mul),
            # bias = bias_init/lr_mul (== 0); runtime gains folded below.
            w = jax.random.normal(keys[idx], (out_f, in_f), jnp.float32) * (1.0 / lr_multiplier)
            b = jnp.zeros((out_f,), jnp.float32)
            self.layers.append({
                "w": w,
                "b": b,
                "weight_gain": lr_multiplier / math.sqrt(in_f),
                "bias_gain": lr_multiplier,
                "activation": act,
            })

        # Pre-fold gains, pre-transpose to (in, out), cast weights to bf16 once.
        self.activations = [l["activation"] for l in self.layers]
        self.kernel_params = []
        for l in self.layers:
            w_eff = (l["w"] * l["weight_gain"]).T.astype(jnp.bfloat16)   # (in, out)
            b_eff = (l["b"] * l["bias_gain"]).reshape(1, -1).astype(jnp.float32)
            self.kernel_params.append((w_eff, b_eff))

    def __call__(self, x):
        shift2batch = x.ndim == 3
        if shift2batch:
            B, K, C = x.shape
            x = x.reshape(B * K, C)
        y = mlp_forward_2d(x, self.kernel_params, self.activations)
        if shift2batch:
            y = y.reshape(B, K, -1)
        return y


# ---------------------------------------------------------------------------
# Pure-JAX references for verification
# ---------------------------------------------------------------------------
def mlp_ref(mlp, x, *, match_bf16=True):
    shift2batch = x.ndim == 3
    if shift2batch:
        B, K, C = x.shape
        x = x.reshape(B * K, C)
    h = x.astype(jnp.float32)
    for layer in mlp.layers:
        w_eff = (layer["w"] * layer["weight_gain"]).T          # (in, out) f32
        b_eff = layer["b"] * layer["bias_gain"]                # (out,)    f32
        if match_bf16:
            y = jnp.dot(h.astype(jnp.bfloat16), w_eff.astype(jnp.bfloat16),
                        preferred_element_type=jnp.float32)
        else:
            y = jnp.dot(h, w_eff, preferred_element_type=jnp.float32)
        y = y + b_eff[None, :]
        if layer["activation"] == "lrelu":
            y = jnp.where(y >= 0, y, 0.2 * y) * _SQRT2
        elif layer["activation"] == "relu":
            y = jnp.maximum(y, 0.0) * _SQRT2
        h = y
    if shift2batch:
        h = h.reshape(B, K, -1)
    return h


if __name__ == "__main__":
    key = jax.random.PRNGKey(0)
    k_params, k_x, k_x2 = jax.random.split(key, 3)

    # Small shapes consistent with the forward: token sequence (B, K, C)
    B, K, C = 2, 8, 32
    features_list = [C, 64, 64, 16]

    mlp = MLP(features_list, activation="lrelu", lr_multiplier=0.1,
              linear_out=True, key=k_params)

    # 1) token-sequence input (B, K, C)
    x = jax.random.normal(k_x, (B, K, C), jnp.float32)
    out = jax.block_until_ready(mlp(x))
    assert out.shape == (B, K, features_list[-1]), out.shape

    ref_matched = mlp_ref(mlp, x, match_bf16=True)
    assert jnp.allclose(out, ref_matched, atol=1e-3, rtol=1e-3), (
        float(jnp.max(jnp.abs(out - ref_matched))))
    ref_f32 = mlp_ref(mlp, x, match_bf16=False)
    assert jnp.allclose(out, ref_f32, atol=5e-2, rtol=5e-2), (
        float(jnp.max(jnp.abs(out - ref_f32))))

    # 2) larger 2-D input exercising the tiled M grid (ragged last block)
    M2 = 900  # -> grid = cdiv(900, 512) = 2, second block partial
    x2 = jax.random.normal(k_x2, (M2, C), jnp.float32)
    out2 = jax.block_until_ready(mlp(x2))
    ref2 = mlp_ref(mlp, x2, match_bf16=True)
    assert out2.shape == (M2, features_list[-1]), out2.shape
    assert jnp.allclose(out2, ref2, atol=1e-3, rtol=1e-3), (
        float(jnp.max(jnp.abs(out2 - ref2))))

    print("KERNEL_OK")
</pallas_src>

<mosaic_0001>
module attributes {stable_mosaic.version = 11 : i64} {
  func.func @_mlp_fused_kernel(%arg0: i32, %arg1: memref<16x32xf32, #tpu.memory_space<vmem>>, %arg2: memref<32x64xbf16, #tpu.memory_space<vmem>>, %arg3: memref<1x64xf32, #tpu.memory_space<vmem>>, %arg4: memref<64x64xbf16, #tpu.memory_space<vmem>>, %arg5: memref<1x64xf32, #tpu.memory_space<vmem>>, %arg6: memref<64x16xbf16, #tpu.memory_space<vmem>>, %arg7: memref<1x16xf32, #tpu.memory_space<vmem>>, %arg8: memref<16x16xf32, #tpu.memory_space<vmem>>) attributes {dimension_semantics = [#tpu.dimension_semantics<parallel>], iteration_bounds = array<i64: 1>, scalar_prefetch = 0 : i64, scratch_operands = 0 : i64, tpu.core_type = #tpu.core_type<tc>, window_params = [{transform_indices = @transform_0, window_bounds = array<i64: 16, 32>}, {pipeline_mode = #tpu.pipeline_mode<synchronous>, transform_indices = @transform_1, window_bounds = array<i64: 32, 64>}, {pipeline_mode = #tpu.pipeline_mode<synchronous>, transform_indices = @transform_2, window_bounds = array<i64: 1, 64>}, {pipeline_mode = #tpu.pipeline_mode<synchronous>, transform_indices = @transform_3, window_bounds = array<i64: 64, 64>}, {pipeline_mode = #tpu.pipeline_mode<synchronous>, transform_indices = @transform_4, window_bounds = array<i64: 1, 64>}, {pipeline_mode = #tpu.pipeline_mode<synchronous>, transform_indices = @transform_5, window_bounds = array<i64: 64, 16>}, {pipeline_mode = #tpu.pipeline_mode<synchronous>, transform_indices = @transform_6, window_bounds = array<i64: 1, 16>}, {transform_indices = @transform_7, window_bounds = array<i64: 16, 16>}]} {
    %c0 = arith.constant 0 : index
    %c0_0 = arith.constant 0 : index
    %0 = vector.load %arg1[%c0, %c0_0] : memref<16x32xf32, #tpu.memory_space<vmem>>, vector<16x32xf32>
    %c0_1 = arith.constant 0 : index
    %c0_2 = arith.constant 0 : index
    %1 = vector.load %arg2[%c0_1, %c0_2] : memref<32x64xbf16, #tpu.memory_space<vmem>>, vector<32x64xbf16>
    %c0_3 = arith.constant 0 : index
    %c0_4 = arith.constant 0 : index
    %2 = vector.load %arg3[%c0_3, %c0_4] : memref<1x64xf32, #tpu.memory_space<vmem>>, vector<1x64xf32>
    %3 = arith.truncf %0 : vector<16x32xf32> to vector<16x32xbf16>
    %cst = arith.constant dense<0.000000e+00> : vector<16x64xf32>
    %4 = tpu.matmul %3, %1, %cst {dimension_numbers = #tpu.dot_dimension_numbers<[1], [0], [0], [1], [0, 0, 1, 1], [], []>} : vector<16x32xbf16>, vector<32x64xbf16>, vector<16x64xf32> -> vector<16x64xf32>
    %5 = vector.broadcast %2 : vector<1x64xf32> to vector<16x64xf32>
    %6 = arith.addf %4, %5 : vector<16x64xf32>
    %cst_5 = arith.constant 0.000000e+00 : f32
    %7 = vector.broadcast %cst_5 : f32 to vector<16x64xf32>
    %8 = arith.cmpf oge, %6, %7 : vector<16x64xf32>
    %cst_6 = arith.constant 2.000000e-01 : f32
    %9 = vector.broadcast %cst_6 : f32 to vector<16x64xf32>
    %10 = arith.mulf %9, %6 : vector<16x64xf32>
    %11 = arith.select %8, %6, %10 : vector<16x64xi1>, vector<16x64xf32>
    %cst_7 = arith.constant 1.41421354 : f32
    %12 = vector.broadcast %cst_7 : f32 to vector<16x64xf32>
    %13 = arith.mulf %11, %12 : vector<16x64xf32>
    %c0_8 = arith.constant 0 : index
    %c0_9 = arith.constant 0 : index
    %14 = vector.load %arg4[%c0_8, %c0_9] : memref<64x64xbf16, #tpu.memory_space<vmem>>, vector<64x64xbf16>
    %c0_10 = arith.constant 0 : index
    %c0_11 = arith.constant 0 : index
    %15 = vector.load %arg5[%c0_10, %c0_11] : memref<1x64xf32, #tpu.memory_space<vmem>>, vector<1x64xf32>
    %16 = arith.truncf %13 : vector<16x64xf32> to vector<16x64xbf16>
    %cst_12 = arith.constant dense<0.000000e+00> : vector<16x64xf32>
    %17 = tpu.matmul %16, %14, %cst_12 {dimension_numbers = #tpu.dot_dimension_numbers<[1], [0], [0], [1], [0, 0, 1, 1], [], []>} : vector<16x64xbf16>, vector<64x64xbf16>, vector<16x64xf32> -> vector<16x64xf32>
    %18 = vector.broadcast %15 : vector<1x64xf32> to vector<16x64xf32>
    %19 = arith.addf %17, %18 : vector<16x64xf32>
    %cst_13 = arith.constant 0.000000e+00 : f32
    %20 = vector.broadcast %cst_13 : f32 to vector<16x64xf32>
    %21 = arith.cmpf oge, %19, %20 : vector<16x64xf32>
    %cst_14 = arith.constant 2.000000e-01 : f32
    %22 = vector.broadcast %cst_14 : f32 to vector<16x64xf32>
    %23 = arith.mulf %22, %19 : vector<16x64xf32>
    %24 = arith.select %21, %19, %23 : vector<16x64xi1>, vector<16x64xf32>
    %cst_15 = arith.constant 1.41421354 : f32
    %25 = vector.broadcast %cst_15 : f32 to vector<16x64xf32>
    %26 = arith.mulf %24, %25 : vector<16x64xf32>
    %c0_16 = arith.constant 0 : index
    %c0_17 = arith.constant 0 : index
    %27 = vector.load %arg6[%c0_16, %c0_17] : memref<64x16xbf16, #tpu.memory_space<vmem>>, vector<64x16xbf16>
    %c0_18 = arith.constant 0 : index
    %c0_19 = arith.constant 0 : index
    %28 = vector.load %arg7[%c0_18, %c0_19] : memref<1x16xf32, #tpu.memory_space<vmem>>, vector<1x16xf32>
    %29 = arith.truncf %26 : vector<16x64xf32> to vector<16x64xbf16>
    %cst_20 = arith.constant dense<0.000000e+00> : vector<16x16xf32>
    %30 = tpu.matmul %29, %27, %cst_20 {dimension_numbers = #tpu.dot_dimension_numbers<[1], [0], [0], [1], [0, 0, 1, 1], [], []>} : vector<16x64xbf16>, vector<64x16xbf16>, vector<16x16xf32> -> vector<16x16xf32>
    %31 = vector.broadcast %28 : vector<1x16xf32> to vector<16x16xf32>
    %32 = arith.addf %30, %31 : vector<16x16xf32>
    %c0_21 = arith.constant 0 : index
    %c0_22 = arith.constant 0 : index
    %33 = vector.load %arg8[%c0_21, %c0_22] : memref<16x16xf32, #tpu.memory_space<vmem>>, vector<16x16xf32>
    tpu.vector_store %arg8[%c0_21, %c0_22], %32 {strides = array<i32>} : memref<16x16xf32, #tpu.memory_space<vmem>>, vector<16x16xf32>,
    return
  }
  func.func @transform_0(%arg0: i32) -> (i32, i32) {
    %c0_i32 = arith.constant 0 : i32
    %c0_i32_0 = arith.constant 0 : i32
    return %arg0, %c0_i32 : i32, i32
  }
  func.func @transform_1(%arg0: i32) -> (i32, i32) {
    %c0_i32 = arith.constant 0 : i32
    %c0_i32_0 = arith.constant 0 : i32
    %c0_i32_1 = arith.constant 0 : i32
    return %c0_i32, %c0_i32_0 : i32, i32
  }
  func.func @transform_2(%arg0: i32) -> (i32, i32) {
    %c0_i32 = arith.constant 0 : i32
    %c0_i32_0 = arith.constant 0 : i32
    %c0_i32_1 = arith.constant 0 : i32
    return %c0_i32, %c0_i32_0 : i32, i32
  }
  func.func @transform_3(%arg0: i32) -> (i32, i32) {
    %c0_i32 = arith.constant 0 : i32
    %c0_i32_0 = arith.constant 0 : i32
    %c0_i32_1 = arith.constant 0 : i32
    return %c0_i32, %c0_i32_0 : i32, i32
  }
  func.func @transform_4(%arg0: i32) -> (i32, i32) {
    %c0_i32 = arith.constant 0 : i32
    %c0_i32_0 = arith.constant 0 : i32
    %c0_i32_1 = arith.constant 0 : i32
    return %c0_i32, %c0_i32_0 : i32, i32
  }
  func.func @transform_5(%arg0: i32) -> (i32, i32) {
    %c0_i32 = arith.constant 0 : i32
    %c0_i32_0 = arith.constant 0 : i32
    %c0_i32_1 = arith.constant 0 : i32
    return %c0_i32, %c0_i32_0 : i32, i32
  }
  func.func @transform_6(%arg0: i32) -> (i32, i32) {
    %c0_i32 = arith.constant 0 : i32
    %c0_i32_0 = arith.constant 0 : i32
    %c0_i32_1 = arith.constant 0 : i32
    return %c0_i32, %c0_i32_0 : i32, i32
  }
  func.func @transform_7(%arg0: i32) -> (i32, i32) {
    %c0_i32 = arith.constant 0 : i32
    %c0_i32_0 = arith.constant 0 : i32
    return %arg0, %c0_i32 : i32, i32
  }
}

</mosaic_0001>

<llo_original>
// kernel: tpu_custom_call.1
$region0: #{tpu_custom_call.1}
  #allocation0 [shape = 'u32[]', space=smem, size = 0x4, offset = 0x4, fixed_abs, tag = 'smem constant byte address 0x4 - core index']
  #allocation1 [shape = 'u32[72,128]{1,0:T(1,128)}', space=vmem, size = 0x9000, scoped, tag = 'internal scratch']
  %s0 = inlined_call_operand.hbm [shape: f32[16,32], index: 0, kind: input, shape index: {}]
  %s1 = inlined_call_operand.hbm [shape: bf16[32,64], index: 1, kind: input, shape index: {}]
  %s2 = inlined_call_operand.vmem [shape: f32[1,64], index: 2, kind: input, shape index: {}]
  %s3 = inlined_call_operand.vmem [shape: bf16[64,64], index: 3, kind: input, shape index: {}]
  %s4 = inlined_call_operand.vmem [shape: f32[1,64], index: 4, kind: input, shape index: {}]
  %s5 = inlined_call_operand.vmem [shape: bf16[64,16], index: 5, kind: input, shape index: {}]
  %s6 = inlined_call_operand.vmem [shape: f32[1,16], index: 6, kind: input, shape index: {}]
  %s7 = inlined_call_operand.hbm [shape: f32[16,16], index: 7, kind: output, shape index: {}]
  %s8 = sld [smem:[#allocation0]]
  $region46: #{tpu_custom_call.1} parent=0
    _
  %s10 = ssub.s32 1, %s8
  %s11 = scalar_select 0, %s10, %s8
  $region1: #{tpu_custom_call.1} parent=0
    #allocation2 [shape = 'u8[8192]{0}', space=vmem, size = 0x2000, scoped, tag = 'input window, operand 0, single buffered']
    #allocation3 [shape = 's32[1]{0}', space=sflag, size = 0x4, scoped, tag = 'scoped memory for tpu_custom_call.1']
    #allocation4 [shape = 's32[1]{0}', space=sflag, size = 0x4, scoped, tag = 'scoped memory for tpu_custom_call.1']
    #allocation5 [shape = 'u8[8192]{0}', space=vmem, size = 0x2000, scoped, tag = 'input window, operand 1, single buffered']
    #allocation6 [shape = 's32[1]{0}', space=sflag, size = 0x4, scoped, tag = 'scoped memory for tpu_custom_call.1']
    #allocation7 [shape = 'u8[8192]{0}', space=vmem, size = 0x2000, scoped, tag = 'output window, operand 0, single buffered']
    %12 = vsyncpa [#allocation3], 0
    %13 = vsyncpa [#allocation6], 0
    %14 = vsyncpa [#allocation4], 0
    // Predicated region
    $region2: #{tpu_custom_call.1} parent=1 // pred_check
      _
    $region3: #{tpu_custom_call.1} parent=1 // pred_check_branch
      %16 = sbr.rel (0) target = $region5
    $region4: #{tpu_custom_call.1} parent=1 // pred_region
      %18 = vsyncadd [#allocation3], 0
      %s19 = sshll.u32 %s0, 4
      %s20 = int_to_ptr.hbm [resolvable:$true] %s19
      %s21 = sshll.u32 [#allocation2], 4
      %s22 = int_to_ptr.vmem [resolvable:$true] %s21
      %27 = dma.hbm_to_vmem [thread:$0]  %s20, 256, %s22, [#allocation3], 128, 128, 8
    $region5: #{tpu_custom_call.1} parent=1 // pred_fallthru
      _
    // Predicated region
    $region6: #{tpu_custom_call.1} parent=1 // pred_check
      _
    $region7: #{tpu_custom_call.1} parent=1 // pred_check_branch
      %29 = sbr.rel (0) target = $region9
    $region8: #{tpu_custom_call.1} parent=1 // pred_region
      %31 = vsyncadd [#allocation6], 0
      %s32 = sshll.u32 %s1, 4
      %s33 = int_to_ptr.hbm [resolvable:$true] %s32
      %s34 = sshll.u32 [#allocation5], 4
      %s35 = int_to_ptr.vmem [resolvable:$true] %s34
      %40 = dma.hbm_to_vmem [thread:$0]  %s33, 256, %s35, [#allocation6], 64, 64, 4
    $region9: #{tpu_custom_call.1} parent=1 // pred_fallthru
      _
    // Predicated region
    $region10: #{tpu_custom_call.1} parent=1 // pred_check
      _
    $region11: #{tpu_custom_call.1} parent=1 // pred_check_branch
      %42 = sbr.rel (0) target = $region13
    $region12: #{tpu_custom_call.1} parent=1 // pred_region
      _
    $region13: #{tpu_custom_call.1} parent=1 // pred_fallthru
      _
    // Predicated region
    $region14: #{tpu_custom_call.1} parent=1 // pred_check
      _
    $region15: #{tpu_custom_call.1} parent=1 // pred_check_branch
      %44 = sbr.rel (0) target = $region17
    $region16: #{tpu_custom_call.1} parent=1 // pred_region
      _
    $region17: #{tpu_custom_call.1} parent=1 // pred_fallthru
      _
    // Predicated region
    $region18: #{tpu_custom_call.1} parent=1 // pred_check
      _
    $region19: #{tpu_custom_call.1} parent=1 // pred_check_branch
      %46 = sbr.rel (0) target = $region21
    $region20: #{tpu_custom_call.1} parent=1 // pred_region
      _
    $region21: #{tpu_custom_call.1} parent=1 // pred_fallthru
      _
    // Predicated region
    $region22: #{tpu_custom_call.1} parent=1 // pred_check
      _
    $region23: #{tpu_custom_call.1} parent=1 // pred_check_branch
      %48 = sbr.rel (0) target = $region25
    $region24: #{tpu_custom_call.1} parent=1 // pred_region
      _
    $region25: #{tpu_custom_call.1} parent=1 // pred_fallthru
      _
    // Predicated region
    $region26: #{tpu_custom_call.1} parent=1 // pred_check
      _
    $region27: #{tpu_custom_call.1} parent=1 // pred_check_branch
      %50 = sbr.rel (0) target = $region29
    $region28: #{tpu_custom_call.1} parent=1 // pred_region
      _
    $region29: #{tpu_custom_call.1} parent=1 // pred_fallthru
      _
    // Predicated region
    $region30: #{tpu_custom_call.1} parent=1 // pred_check
      _
    $region31: #{tpu_custom_call.1} parent=1 // pred_check_branch
      %52 = sbr.rel (0) target = $region33
    $region32: #{tpu_custom_call.1} parent=1 // pred_region
      %54 = dma.done [#allocation3], 256
    $region33: #{tpu_custom_call.1} parent=1 // pred_fallthru
      _
    // Predicated region
    $region34: #{tpu_custom_call.1} parent=1 // pred_check
      _
    $region35: #{tpu_custom_call.1} parent=1 // pred_check_branch
      %56 = sbr.rel (0) target = $region37
    $region36: #{tpu_custom_call.1} parent=1 // pred_region
      %58 = dma.done [#allocation6], 256
    $region37: #{tpu_custom_call.1} parent=1 // pred_fallthru
      _
    %v60 = vld [vmem:[#allocation2] sm:$0xff]
    %v61 = vld [vmem:[#allocation2 + $0x8] sm:$0xff]
    %v62 = vld [vmem:[#allocation5] sm:$0xf]
    %v63 = vld [vmem:[#allocation5 + $0x4] sm:$0xf]
    %v64 = vld [vmem:[#allocation5 + $0x8] sm:$0xf]
    %v65 = vld [vmem:[#allocation5 + $0xc] sm:$0xf]
    %v66 = vld [vmem:[%s2] sm:$0x1]
    %v67 = vpack.c.bf16 %v61, %v60
    %v69 = vperm.slane %v66, 0
    %v75 = vunpack.c.l.b16 %v62
    %v76 = vunpack.c.l.b16 %v63
    %v77 = vunpack.c.l.b16 %v64
    %v78 = vunpack.c.l.b16 %v65
    %v79 = vpack.c.b16 %v76, %v75
    %v80 = vpack.c.b16 %v78, %v77
    %vm83 = vcmask 261120
    %v85 = vsel %vm83, %v67, 0
    %87 = vmatpush.bf16.msra.mxu0 0
    %88 = vmatpush.bf16.msra.mxu0 0
    %89 = vmatpush.bf16.msra.mxu0 0
    %90 = vmatpush.bf16.msra.mxu0 0
    %91 = vmatpush.bf16.msra.mxu0 0
    %92 = vmatpush.bf16.msra.mxu0 0
    %93 = vmatpush.bf16.msra.mxu0 %v80
    %94 = vmatpush.bf16.msra.mxu0 %v79
    %95 = vmatmul.bf16.gmra.mxu0 %v85
    %v96 = vpop.f32.mrf.mxu0
    %v97 = vadd.f32 %v69, %v96
    %v98 = vpop.f32.mrf.mxu0
    %v99 = vadd.f32 %v69, %v98
    %100 = vdwg.mxu0
    %vm101 = vcmp.ge.f32.partialorder %v97, 0.0
    %vm102 = vcmp.ge.f32.partialorder %v99, 0.0
    %v103 = vmul.f32 %v97, 0.2
    %v104 = vmul.f32 %v99, 0.2
    %v105 = vsel %vm101, %v97, %v103
    %v106 = vsel %vm102, %v99, %v104
    %v107 = vmul.f32 %v105, 1.4142135
    %v108 = vmul.f32 %v106, 1.4142135
    %v109 = vld [vmem:[%s3] sm:$0xf]
    %v110 = vld [vmem:[%s3 + $0x4] sm:$0xf]
    %v111 = vld [vmem:[%s3 + $0x8] sm:$0xf]
    %v112 = vld [vmem:[%s3 + $0xc] sm:$0xf]
    %v113 = vld [vmem:[%s3 + $0x10] sm:$0xf]
    %v114 = vld [vmem:[%s3 + $0x14] sm:$0xf]
    %v115 = vld [vmem:[%s3 + $0x18] sm:$0xf]
    %v116 = vld [vmem:[%s3 + $0x1c] sm:$0xf]
    %v117 = vld [vmem:[%s4] sm:$0x1]
    %v118 = vpack.c.bf16 %v108, %v107
    %v120 = vperm.slane %v117, 0
    %v130 = vunpack.c.l.b16 %v109
    %v131 = vunpack.c.l.b16 %v110
    %v132 = vunpack.c.l.b16 %v111
    %v133 = vunpack.c.l.b16 %v112
    %v134 = vunpack.c.l.b16 %v113
    %v135 = vunpack.c.l.b16 %v114
    %v136 = vunpack.c.l.b16 %v115
    %v137 = vunpack.c.l.b16 %v116
    %v138 = vpack.c.b16 %v131, %v130
    %v139 = vpack.c.b16 %v133, %v132
    %v140 = vpack.c.b16 %v135, %v134
    %v141 = vpack.c.b16 %v137, %v136
    %vm146 = vcmask 523264
    %v148 = vsel %vm146, %v118, 0
    %150 = vmatpush.bf16.msra.mxu0 0
    %151 = vmatpush.bf16.msra.mxu0 0
    %152 = vmatpush.bf16.msra.mxu0 0
    %153 = vmatpush.bf16.msra.mxu0 0
    %154 = vmatpush.bf16.msra.mxu0 %v141
    %155 = vmatpush.bf16.msra.mxu0 %v140
    %156 = vmatpush.bf16.msra.mxu0 %v139
    %157 = vmatpush.bf16.msra.mxu0 %v138
    %158 = vmatmul.bf16.gmra.mxu0 %v148
    %v159 = vpop.f32.mrf.mxu0
    %v160 = vadd.f32 %v120, %v159
    %v161 = vpop.f32.mrf.mxu0
    %v162 = vadd.f32 %v120, %v161
    %163 = vdwg.mxu0
    %vm164 = vcmp.ge.f32.partialorder %v160, 0.0
    %vm165 = vcmp.ge.f32.partialorder %v162, 0.0
    %v166 = vmul.f32 %v160, 0.2
    %v167 = vmul.f32 %v162, 0.2
    %v168 = vsel %vm164, %v160, %v166
    %v169 = vsel %vm165, %v162, %v167
    %v170 = vmul.f32 %v168, 1.4142135
    %v171 = vmul.f32 %v169, 1.4142135
    %v172 = vld [vmem:[%s5] sm:$0xf]
    %v173 = vld [vmem:[%s5 + $0x4] sm:$0xf]
    %v174 = vld [vmem:[%s5 + $0x8] sm:$0xf]
    %v175 = vld [vmem:[%s5 + $0xc] sm:$0xf]
    %v176 = vld [vmem:[%s5 + $0x10] sm:$0xf]
    %v177 = vld [vmem:[%s5 + $0x14] sm:$0xf]
    %v178 = vld [vmem:[%s5 + $0x18] sm:$0xf]
    %v179 = vld [vmem:[%s5 + $0x1c] sm:$0xf]
    %v180 = vld [vmem:[%s6] sm:$0x1]
    %v181 = vpack.c.bf16 %v171, %v170
    %v183 = vperm.slane %v180, 0
    %v193 = vunpack.c.l.b16 %v172
    %v194 = vunpack.c.l.b16 %v173
    %v195 = vunpack.c.l.b16 %v174
    %v196 = vunpack.c.l.b16 %v175
    %v197 = vunpack.c.l.b16 %v176
    %v198 = vunpack.c.l.b16 %v177
    %v199 = vunpack.c.l.b16 %v178
    %v200 = vunpack.c.l.b16 %v179
    %v201 = vpack.c.b16 %v194, %v193
    %v202 = vpack.c.b16 %v196, %v195
    %v203 = vpack.c.b16 %v198, %v197
    %v204 = vpack.c.b16 %v200, %v199
    %v210 = vsel %vm146, %v181, 0
    %212 = vmatpush.bf16.msra.mxu0 0
    %213 = vmatpush.bf16.msra.mxu0 0
    %214 = vmatpush.bf16.msra.mxu0 0
    %215 = vmatpush.bf16.msra.mxu0 0
    %216 = vmatpush.bf16.msra.mxu0 %v204
    %217 = vmatpush.bf16.msra.mxu0 %v203
    %218 = vmatpush.bf16.msra.mxu0 %v202
    %219 = vmatpush.bf16.msra.mxu0 %v201
    %220 = vmatmul.bf16.gmra.mxu0 %v210
    %v221 = vpop.f32.mrf.mxu0
    %v222 = vadd.f32 %v183, %v221
    %v223 = vpop.f32.mrf.mxu0
    %v224 = vadd.f32 %v183, %v223
    %225 = vdwg.mxu0
    %vm226 = vcmask 130048
    %227 = vst.msk [vmem:[#allocation7] sm:$0xff] %vm226, %v222
    %228 = vst.msk [vmem:[#allocation7 + $0x8] sm:$0xff] %vm226, %v224
    // Predicated region
    $region38: #{tpu_custom_call.1} parent=1 // pred_check
      _
    $region39: #{tpu_custom_call.1} parent=1 // pred_check_branch
      %230 = sbr.rel (0) target = $region41
    $region40: #{tpu_custom_call.1} parent=1 // pred_region
      %232 = vsyncadd [#allocation4], 0
      %s233 = sshll.u32 [#allocation7], 4
      %s234 = int_to_ptr.vmem [resolvable:$true] %s233
      %s235 = sshll.u32 %s7, 4
      %s236 = int_to_ptr.hbm [resolvable:$true] %s235
      %241 = dma.vmem_to_hbm [thread:$0]  %s234, 256, %s236, [#allocation4], 128, 128, 8
    $region41: #{tpu_custom_call.1} parent=1 // pred_fallthru
      _
    // Predicated region
    $region42: #{tpu_custom_call.1} parent=1 // pred_check
      _
    $region43: #{tpu_custom_call.1} parent=1 // pred_check_branch
      %243 = sbr.rel (0) target = $region45
    $region44: #{tpu_custom_call.1} parent=1 // pred_region
      %245 = dma.done [#allocation4], 256
    $region45: #{tpu_custom_call.1} parent=1 // pred_fallthru
      _
    %246 = vsyncpa [#allocation3], 1
    %247 = vsyncpa [#allocation6], 1
    %248 = vsyncpa [#allocation4], 1

</llo_original>
